<compile_context>
chip_gen: v5e
topology: v5e:2x2
jax: 0.10.0
libtpu: 0.0.40
codegen_flags: <defaults>
</compile_context>

<pallas_src>
import math
from functools import partial

import jax
import jax.numpy as jnp
from jax import lax
from jax.experimental import pallas as pl
from jax.experimental.pallas import tpu as pltpu


def _attention_kernel(x_ref, g_ref, b_ref, wqkv_ref, wo_ref, bo_ref, o_ref,
                      head_scratch, *, heads, dim_head, seq_len, batch_tile):
    N = seq_len
    inner = heads * dim_head

    # (Bt, N, D) -> (Bt*N, D): free merge (N multiple of 8), f32 for LN math.
    x = x_ref[...].reshape(batch_tile * N, -1).astype(jnp.float32)

    # --- LayerNorm(dim), eps=1e-5, elementwise affine (PyTorch defaults) ---
    mean = jnp.mean(x, axis=-1, keepdims=True)
    var = jnp.mean(jnp.square(x - mean), axis=-1, keepdims=True)
    xn = (x - mean) * lax.rsqrt(var + 1e-5)
    xn = xn * g_ref[...] + b_ref[...]                             # (Bt*N, D)

    # --- to_qkv: Linear(D -> 3*inner, bias=False); scale pre-folded into Q ---
    qkv = jnp.dot(xn.astype(jnp.bfloat16), wqkv_ref[...],
                  preferred_element_type=jnp.float32)             # (Bt*N, 3*inner)

    # --- per-(batch-element, head) attention; dropout(p=0) is identity ---
    for b in range(batch_tile):                                   # static unroll
        qkv_b = qkv[b * N:(b + 1) * N, :]                         # (N, 3*inner)
        for h in range(heads):                                    # static unroll
            lo = h * dim_head
            q_h = qkv_b[:, lo:lo + dim_head]
            k_h = qkv_b[:, inner + lo:inner + lo + dim_head]
            v_h = qkv_b[:, 2 * inner + lo:2 * inner + lo + dim_head]

            # dots = q @ k^T  (scale already folded into Wqkv's Q columns)
            dots = lax.dot_general(
                q_h.astype(jnp.bfloat16), k_h.astype(jnp.bfloat16),
                dimension_numbers=(((1,), (1,)), ((), ())),
                preferred_element_type=jnp.float32)               # (N, N)

            # numerically-stable softmax over keys (f32); EUP reciprocal
            m = jnp.max(dots, axis=-1, keepdims=True)
            p = jnp.exp(dots - m)
            attn = p * pl.reciprocal(jnp.sum(p, axis=-1, keepdims=True),
                                     approx=True)

            # bf16 probabilities (f32 accumulation) keep the MXU at full rate;
            # this is the dominant (bounded) error term vs the f32 reference.
            head_out = jnp.dot(attn.astype(jnp.bfloat16),
                               v_h.astype(jnp.bfloat16),
                               preferred_element_type=jnp.float32)  # (N, dh)
            head_scratch[b * N:(b + 1) * N, lo:lo + dim_head] = head_out

    # --- to_out: one (Bt*N, inner) x (inner, D) projection (+ bias) ---
    out = jnp.dot(head_scratch[...].astype(jnp.bfloat16), wo_ref[...],
                  preferred_element_type=jnp.float32) + bo_ref[...]
    o_ref[...] = out.reshape(batch_tile, N, -1).astype(o_ref.dtype)


def _const_spec(shape):
    """Grid-invariant parameter block: single-buffered if supported."""
    idx = lambda i: (0,) * len(shape)
    try:
        return pl.BlockSpec(shape, idx, pipeline_mode=pl.Buffered(1))
    except TypeError:  # older jax without pipeline_mode kwarg
        return pl.BlockSpec(shape, idx)


def attention(x, gamma, beta, wqkv, wo, bo, *, heads, dim_head):
    """x: (B, N, D) f32 tokens.  gamma/beta: (D,) LayerNorm affine.
    wqkv: (D, 3*heads*dim_head)  (transposed vs. PyTorch to_qkv.weight).
    wo: (heads*dim_head, D), bo: (D,)  (transposed to_out Linear).
    Returns (B, N, D)."""
    B, N, D = x.shape
    inner = heads * dim_head
    assert wqkv.shape == (D, 3 * inner)
    assert wo.shape == (inner, D)
    scale = dim_head ** (-0.5)

    # Fold softmax scale into the Q columns of Wqkv (f32, before bf16 cast).
    wqkv_scaled = wqkv.astype(jnp.float32).at[:, :inner].multiply(scale)
    wqkv_b = wqkv_scaled.astype(jnp.bfloat16)
    wo_b = wo.astype(jnp.bfloat16)

    g2 = gamma.reshape(1, D).astype(jnp.float32)
    be2 = beta.reshape(1, D).astype(jnp.float32)
    bo2 = bo.reshape(1, D).astype(jnp.float32)

    # --- generation-aware VMEM budget (≈75% of physical: 48 MiB v7x, 96 v6e) ---
    try:
        vmem_cap = int(pltpu.get_tpu_info().vmem_capacity_bytes)
    except Exception:
        vmem_cap = 64 * 1024 * 1024  # conservative (v7x per-TC)
    vmem_budget = int(vmem_cap * 0.75)

    def working_set(bt_):
        m = bt_ * N
        return (2 * 2 * m * D * 4                      # x + out tiles, double-buffered f32
                + 2 * (D * 3 * inner + inner * D)      # bf16 weights, single-buffered
                + 4 * D * 4                            # gamma/beta/bo
                + m * 3 * inner * 4                    # qkv intermediate (f32)
                + m * inner * 4                        # head-output scratch
                + 2 * N * N * 4)                       # one head's score/prob tiles

    # Batch tile: fill the MXU M dimension (target 256 rows), divide B, fit VMEM.
    target_m = 256
    bt = min(B, max(1, -(-target_m // N)))
    while bt > 1 and (B % bt != 0 or 1.5 * working_set(bt) > vmem_budget):
        bt -= 1

    vmem_limit = int(min(vmem_budget,
                         max(32 * 1024 * 1024, 1.5 * working_set(bt))))

    flops = (2 * B * N * D * 3 * inner             # QKV projection
             + 4 * B * heads * N * N * dim_head    # qk^T and attn@v
             + 2 * B * N * inner * D)              # output projection
    bytes_accessed = (2 * B * N * D * 4                       # x in, out
                      + 2 * (D * 3 * inner + inner * D)       # bf16 weights
                      + 4 * D * 4)                            # gamma/beta/bo
    cost = pl.CostEstimate(flops=int(flops),
                           transcendentals=int(B * heads * N * (N + 1)),
                           bytes_accessed=int(bytes_accessed))

    kernel = partial(_attention_kernel, heads=heads, dim_head=dim_head,
                     seq_len=N, batch_tile=bt)

    return pl.pallas_call(
        kernel,
        out_shape=jax.ShapeDtypeStruct((B, N, D), x.dtype),
        grid_spec=pltpu.PrefetchScalarGridSpec(
            num_scalar_prefetch=0,
            grid=(B // bt,),
            in_specs=[
                pl.BlockSpec((bt, N, D), lambda i: (i, 0, 0)),   # x (batch tile)
                _const_spec((1, D)),                             # gamma
                _const_spec((1, D)),                             # beta
                _const_spec((D, 3 * inner)),                     # Wqkv (bf16, scaled Q)
                _const_spec((inner, D)),                         # Wo (bf16)
                _const_spec((1, D)),                             # bo
            ],
            out_specs=pl.BlockSpec((bt, N, D), lambda i: (i, 0, 0)),
            scratch_shapes=[pltpu.VMEM((bt * N, inner), jnp.float32)],
        ),
        compiler_params=pltpu.CompilerParams(
            dimension_semantics=("parallel",),
            vmem_limit_bytes=vmem_limit,
        ),
        cost_estimate=cost,
    )(x, g2, be2, wqkv_b, wo_b, bo2)


def _reference(x, gamma, beta, wqkv, wo, bo, *, heads, dim_head):
    # pure-JAX f32 reference of the same forward pass
    B, N, D = x.shape
    inner = heads * dim_head
    mean = jnp.mean(x, axis=-1, keepdims=True)
    var = jnp.mean(jnp.square(x - mean), axis=-1, keepdims=True)
    xn = (x - mean) * lax.rsqrt(var + 1e-5) * gamma + beta
    qkv = xn @ wqkv
    q, k, v = jnp.split(qkv, 3, axis=-1)
    split = lambda t: t.reshape(B, N, heads, dim_head).transpose(0, 2, 1, 3)
    q, k, v = split(q), split(k), split(v)
    dots = jnp.einsum("bhnd,bhmd->bhnm", q, k) * dim_head ** (-0.5)
    attn = jax.nn.softmax(dots, axis=-1)
    out = jnp.einsum("bhnm,bhmd->bhnd", attn, v)
    out = out.transpose(0, 2, 1, 3).reshape(B, N, inner)
    return out @ wo + bo


if __name__ == "__main__":
    # Small shapes consistent with the module: (batch, seq, dim) tokens,
    # heads * dim_head = inner_dim; project_out=True (heads != 1).
    # dim and inner are multiples of 128 for lane-dense loads/stores.
    B, N, D = 2, 16, 128
    heads, dim_head = 2, 64
    inner = heads * dim_head

    key = jax.random.PRNGKey(0)
    kx, kqkv, kwo, kbo = jax.random.split(key, 4)

    x = jax.random.normal(kx, (B, N, D), dtype=jnp.float32)

    # deterministic parameter init (LayerNorm: ones/zeros like PyTorch default;
    # Linear: uniform(-1/sqrt(fan_in), 1/sqrt(fan_in)) like PyTorch default)
    gamma = jnp.ones((D,), jnp.float32)
    beta = jnp.zeros((D,), jnp.float32)
    lim_qkv = 1.0 / math.sqrt(D)
    wqkv = jax.random.uniform(kqkv, (D, 3 * inner), jnp.float32, -lim_qkv, lim_qkv)
    lim_o = 1.0 / math.sqrt(inner)
    wo = jax.random.uniform(kwo, (inner, D), jnp.float32, -lim_o, lim_o)
    bo = jax.random.uniform(kbo, (D,), jnp.float32, -lim_o, lim_o)

    out = attention(x, gamma, beta, wqkv, wo, bo, heads=heads, dim_head=dim_head)
    out = jax.block_until_ready(out)

    ref = _reference(x, gamma, beta, wqkv, wo, bo, heads=heads, dim_head=dim_head)
    assert out.shape == (B, N, D)
    # bf16 matmul operands (f32 accumulation) + approx reciprocal => loose tol
    assert jnp.allclose(out, ref, atol=5e-2, rtol=5e-2), "mismatch vs reference"

    print("KERNEL_OK")
</pallas_src>

<mosaic_0001>
module attributes {stable_mosaic.version = 11 : i64} {
  func.func @_attention_kernel(%arg0: i32, %arg1: memref<2x16x128xf32, #tpu.memory_space<vmem>>, %arg2: memref<1x128xf32, #tpu.memory_space<vmem>>, %arg3: memref<1x128xf32, #tpu.memory_space<vmem>>, %arg4: memref<128x384xbf16, #tpu.memory_space<vmem>>, %arg5: memref<128x128xbf16, #tpu.memory_space<vmem>>, %arg6: memref<1x128xf32, #tpu.memory_space<vmem>>, %arg7: memref<2x16x128xf32, #tpu.memory_space<vmem>>, %arg8: memref<32x128xf32, #tpu.memory_space<vmem>>) attributes {dimension_semantics = [#tpu.dimension_semantics<parallel>], iteration_bounds = array<i64: 1>, scalar_prefetch = 0 : i64, scratch_operands = 1 : i64, tpu.core_type = #tpu.core_type<tc>, window_params = [{transform_indices = @transform_0, window_bounds = array<i64: 2, 16, 128>}, {pipeline_mode = #tpu.pipeline_mode<synchronous>, transform_indices = @transform_1, window_bounds = array<i64: 1, 128>}, {pipeline_mode = #tpu.pipeline_mode<synchronous>, transform_indices = @transform_2, window_bounds = array<i64: 1, 128>}, {pipeline_mode = #tpu.pipeline_mode<synchronous>, transform_indices = @transform_3, window_bounds = array<i64: 128, 384>}, {pipeline_mode = #tpu.pipeline_mode<synchronous>, transform_indices = @transform_4, window_bounds = array<i64: 128, 128>}, {pipeline_mode = #tpu.pipeline_mode<synchronous>, transform_indices = @transform_5, window_bounds = array<i64: 1, 128>}, {transform_indices = @transform_6, window_bounds = array<i64: 2, 16, 128>}]} {
    %c0 = arith.constant 0 : index
    %c0_0 = arith.constant 0 : index
    %c0_1 = arith.constant 0 : index
    %0 = vector.load %arg1[%c0, %c0_0, %c0_1] : memref<2x16x128xf32, #tpu.memory_space<vmem>>, vector<2x16x128xf32>
    %1 = vector.shape_cast %0 : vector<2x16x128xf32> to vector<32x128xf32>
    %cst = arith.constant dense<0.000000e+00> : vector<32xf32>
    %2 = vector.multi_reduction <add>, %1, %cst [1] : vector<32x128xf32> to vector<32xf32>
    %3 = vector.shape_cast %2 : vector<32xf32> to vector<32x1xf32>
    %cst_2 = arith.constant 1.280000e+02 : f32
    %4 = vector.broadcast %cst_2 : f32 to vector<32x1xf32>
    %5 = arith.divf %3, %4 : vector<32x1xf32>
    %6 = vector.broadcast %5 : vector<32x1xf32> to vector<32x128xf32>
    %7 = arith.subf %1, %6 : vector<32x128xf32>
    %8 = arith.mulf %7, %7 : vector<32x128xf32>
    %cst_3 = arith.constant dense<0.000000e+00> : vector<32xf32>
    %9 = vector.multi_reduction <add>, %8, %cst_3 [1] : vector<32x128xf32> to vector<32xf32>
    %10 = vector.shape_cast %9 : vector<32xf32> to vector<32x1xf32>
    %cst_4 = arith.constant 1.280000e+02 : f32
    %11 = vector.broadcast %cst_4 : f32 to vector<32x1xf32>
    %12 = arith.divf %10, %11 : vector<32x1xf32>
    %13 = vector.broadcast %5 : vector<32x1xf32> to vector<32x128xf32>
    %14 = arith.subf %1, %13 : vector<32x128xf32>
    %cst_5 = arith.constant 9.99999974E-6 : f32
    %15 = vector.broadcast %cst_5 : f32 to vector<32x1xf32>
    %16 = arith.addf %12, %15 : vector<32x1xf32>
    %17 = math.rsqrt %16 : vector<32x1xf32>
    %18 = vector.broadcast %17 : vector<32x1xf32> to vector<32x128xf32>
    %19 = arith.mulf %14, %18 : vector<32x128xf32>
    %c0_6 = arith.constant 0 : index
    %c0_7 = arith.constant 0 : index
    %20 = vector.load %arg2[%c0_6, %c0_7] : memref<1x128xf32, #tpu.memory_space<vmem>>, vector<1x128xf32>
    %21 = vector.broadcast %20 : vector<1x128xf32> to vector<32x128xf32>
    %22 = arith.mulf %19, %21 : vector<32x128xf32>
    %c0_8 = arith.constant 0 : index
    %c0_9 = arith.constant 0 : index
    %23 = vector.load %arg3[%c0_8, %c0_9] : memref<1x128xf32, #tpu.memory_space<vmem>>, vector<1x128xf32>
    %24 = vector.broadcast %23 : vector<1x128xf32> to vector<32x128xf32>
    %25 = arith.addf %22, %24 : vector<32x128xf32>
    %26 = arith.truncf %25 : vector<32x128xf32> to vector<32x128xbf16>
    %c0_10 = arith.constant 0 : index
    %c0_11 = arith.constant 0 : index
    %27 = vector.load %arg4[%c0_10, %c0_11] : memref<128x384xbf16, #tpu.memory_space<vmem>>, vector<128x384xbf16>
    %cst_12 = arith.constant dense<0.000000e+00> : vector<32x384xf32>
    %28 = tpu.matmul %26, %27, %cst_12 {dimension_numbers = #tpu.dot_dimension_numbers<[1], [0], [0], [1], [0, 0, 1, 1], [], []>} : vector<32x128xbf16>, vector<128x384xbf16>, vector<32x384xf32> -> vector<32x384xf32>
    %29 = vector.extract_strided_slice %28 {offsets = [0, 0], sizes = [16, 384], strides = [1, 1]} : vector<32x384xf32> to vector<16x384xf32>
    %30 = vector.extract_strided_slice %29 {offsets = [0, 0], sizes = [16, 64], strides = [1, 1]} : vector<16x384xf32> to vector<16x64xf32>
    %31 = vector.extract_strided_slice %29 {offsets = [0, 128], sizes = [16, 64], strides = [1, 1]} : vector<16x384xf32> to vector<16x64xf32>
    %32 = vector.extract_strided_slice %29 {offsets = [0, 256], sizes = [16, 64], strides = [1, 1]} : vector<16x384xf32> to vector<16x64xf32>
    %33 = arith.truncf %30 : vector<16x64xf32> to vector<16x64xbf16>
    %34 = arith.truncf %31 : vector<16x64xf32> to vector<16x64xbf16>
    %cst_13 = arith.constant dense<0.000000e+00> : vector<16x16xf32>
    %35 = tpu.matmul %33, %34, %cst_13 {dimension_numbers = #tpu.dot_dimension_numbers<[1], [1], [0], [0], [0, 0, 1, 0], [], []>} : vector<16x64xbf16>, vector<16x64xbf16>, vector<16x16xf32> -> vector<16x16xf32>
    %cst_14 = arith.constant dense<0xFF800000> : vector<16xf32>
    %36 = vector.multi_reduction <maximumf>, %35, %cst_14 [1] : vector<16x16xf32> to vector<16xf32>
    %37 = vector.shape_cast %36 : vector<16xf32> to vector<16x1xf32>
    %38 = vector.broadcast %37 : vector<16x1xf32> to vector<16x16xf32>
    %39 = arith.subf %35, %38 : vector<16x16xf32>
    %40 = math.exp %39 : vector<16x16xf32>
    %cst_15 = arith.constant dense<0.000000e+00> : vector<16xf32>
    %41 = vector.multi_reduction <add>, %40, %cst_15 [1] : vector<16x16xf32> to vector<16xf32>
    %42 = vector.shape_cast %41 : vector<16xf32> to vector<16x1xf32>
    %43 = tpu.reciprocal %42 {approx = true} : vector<16x1xf32> -> vector<16x1xf32>
    %44 = vector.broadcast %43 : vector<16x1xf32> to vector<16x16xf32>
    %45 = arith.mulf %40, %44 : vector<16x16xf32>
    %46 = arith.truncf %45 : vector<16x16xf32> to vector<16x16xbf16>
    %47 = arith.truncf %32 : vector<16x64xf32> to vector<16x64xbf16>
    %cst_16 = arith.constant dense<0.000000e+00> : vector<16x64xf32>
    %48 = tpu.matmul %46, %47, %cst_16 {dimension_numbers = #tpu.dot_dimension_numbers<[1], [0], [0], [1], [0, 0, 1, 1], [], []>} : vector<16x16xbf16>, vector<16x64xbf16>, vector<16x64xf32> -> vector<16x64xf32>
    %c0_17 = arith.constant 0 : index
    %c0_18 = arith.constant 0 : index
    %49 = vector.load %arg8[%c0_17, %c0_18] : memref<32x128xf32, #tpu.memory_space<vmem>>, vector<16x64xf32>
    tpu.vector_store %arg8[%c0_17, %c0_18], %48 {strides = array<i32>} : memref<32x128xf32, #tpu.memory_space<vmem>>, vector<16x64xf32>,
    %50 = vector.extract_strided_slice %29 {offsets = [0, 64], sizes = [16, 64], strides = [1, 1]} : vector<16x384xf32> to vector<16x64xf32>
    %51 = vector.extract_strided_slice %29 {offsets = [0, 192], sizes = [16, 64], strides = [1, 1]} : vector<16x384xf32> to vector<16x64xf32>
    %52 = vector.extract_strided_slice %29 {offsets = [0, 320], sizes = [16, 64], strides = [1, 1]} : vector<16x384xf32> to vector<16x64xf32>
    %53 = arith.truncf %50 : vector<16x64xf32> to vector<16x64xbf16>
    %54 = arith.truncf %51 : vector<16x64xf32> to vector<16x64xbf16>
    %cst_19 = arith.constant dense<0.000000e+00> : vector<16x16xf32>
    %55 = tpu.matmul %53, %54, %cst_19 {dimension_numbers = #tpu.dot_dimension_numbers<[1], [1], [0], [0], [0, 0, 1, 0], [], []>} : vector<16x64xbf16>, vector<16x64xbf16>, vector<16x16xf32> -> vector<16x16xf32>
    %cst_20 = arith.constant dense<0xFF800000> : vector<16xf32>
    %56 = vector.multi_reduction <maximumf>, %55, %cst_20 [1] : vector<16x16xf32> to vector<16xf32>
    %57 = vector.shape_cast %56 : vector<16xf32> to vector<16x1xf32>
    %58 = vector.broadcast %57 : vector<16x1xf32> to vector<16x16xf32>
    %59 = arith.subf %55, %58 : vector<16x16xf32>
    %60 = math.exp %59 : vector<16x16xf32>
    %cst_21 = arith.constant dense<0.000000e+00> : vector<16xf32>
    %61 = vector.multi_reduction <add>, %60, %cst_21 [1] : vector<16x16xf32> to vector<16xf32>
    %62 = vector.shape_cast %61 : vector<16xf32> to vector<16x1xf32>
    %63 = tpu.reciprocal %62 {approx = true} : vector<16x1xf32> -> vector<16x1xf32>
    %64 = vector.broadcast %63 : vector<16x1xf32> to vector<16x16xf32>
    %65 = arith.mulf %60, %64 : vector<16x16xf32>
    %66 = arith.truncf %65 : vector<16x16xf32> to vector<16x16xbf16>
    %67 = arith.truncf %52 : vector<16x64xf32> to vector<16x64xbf16>
    %cst_22 = arith.constant dense<0.000000e+00> : vector<16x64xf32>
    %68 = tpu.matmul %66, %67, %cst_22 {dimension_numbers = #tpu.dot_dimension_numbers<[1], [0], [0], [1], [0, 0, 1, 1], [], []>} : vector<16x16xbf16>, vector<16x64xbf16>, vector<16x64xf32> -> vector<16x64xf32>
    %c0_23 = arith.constant 0 : index
    %c64 = arith.constant 64 : index
    %69 = vector.load %arg8[%c0_23, %c64] : memref<32x128xf32, #tpu.memory_space<vmem>>, vector<16x64xf32>
    tpu.vector_store %arg8[%c0_23, %c64], %68 {strides = array<i32>} : memref<32x128xf32, #tpu.memory_space<vmem>>, vector<16x64xf32>,
    %70 = vector.extract_strided_slice %28 {offsets = [16, 0], sizes = [16, 384], strides = [1, 1]} : vector<32x384xf32> to vector<16x384xf32>
    %71 = vector.extract_strided_slice %70 {offsets = [0, 0], sizes = [16, 64], strides = [1, 1]} : vector<16x384xf32> to vector<16x64xf32>
    %72 = vector.extract_strided_slice %70 {offsets = [0, 128], sizes = [16, 64], strides = [1, 1]} : vector<16x384xf32> to vector<16x64xf32>
    %73 = vector.extract_strided_slice %70 {offsets = [0, 256], sizes = [16, 64], strides = [1, 1]} : vector<16x384xf32> to vector<16x64xf32>
    %74 = arith.truncf %71 : vector<16x64xf32> to vector<16x64xbf16>
    %75 = arith.truncf %72 : vector<16x64xf32> to vector<16x64xbf16>
    %cst_24 = arith.constant dense<0.000000e+00> : vector<16x16xf32>
    %76 = tpu.matmul %74, %75, %cst_24 {dimension_numbers = #tpu.dot_dimension_numbers<[1], [1], [0], [0], [0, 0, 1, 0], [], []>} : vector<16x64xbf16>, vector<16x64xbf16>, vector<16x16xf32> -> vector<16x16xf32>
    %cst_25 = arith.constant dense<0xFF800000> : vector<16xf32>
    %77 = vector.multi_reduction <maximumf>, %76, %cst_25 [1] : vector<16x16xf32> to vector<16xf32>
    %78 = vector.shape_cast %77 : vector<16xf32> to vector<16x1xf32>
    %79 = vector.broadcast %78 : vector<16x1xf32> to vector<16x16xf32>
    %80 = arith.subf %76, %79 : vector<16x16xf32>
    %81 = math.exp %80 : vector<16x16xf32>
    %cst_26 = arith.constant dense<0.000000e+00> : vector<16xf32>
    %82 = vector.multi_reduction <add>, %81, %cst_26 [1] : vector<16x16xf32> to vector<16xf32>
    %83 = vector.shape_cast %82 : vector<16xf32> to vector<16x1xf32>
    %84 = tpu.reciprocal %83 {approx = true} : vector<16x1xf32> -> vector<16x1xf32>
    %85 = vector.broadcast %84 : vector<16x1xf32> to vector<16x16xf32>
    %86 = arith.mulf %81, %85 : vector<16x16xf32>
    %87 = arith.truncf %86 : vector<16x16xf32> to vector<16x16xbf16>
    %88 = arith.truncf %73 : vector<16x64xf32> to vector<16x64xbf16>
    %cst_27 = arith.constant dense<0.000000e+00> : vector<16x64xf32>
    %89 = tpu.matmul %87, %88, %cst_27 {dimension_numbers = #tpu.dot_dimension_numbers<[1], [0], [0], [1], [0, 0, 1, 1], [], []>} : vector<16x16xbf16>, vector<16x64xbf16>, vector<16x64xf32> -> vector<16x64xf32>
    %c16 = arith.constant 16 : index
    %c0_28 = arith.constant 0 : index
    %90 = vector.load %arg8[%c16, %c0_28] : memref<32x128xf32, #tpu.memory_space<vmem>>, vector<16x64xf32>
    tpu.vector_store %arg8[%c16, %c0_28], %89 {strides = array<i32>} : memref<32x128xf32, #tpu.memory_space<vmem>>, vector<16x64xf32>,
    %91 = vector.extract_strided_slice %70 {offsets = [0, 64], sizes = [16, 64], strides = [1, 1]} : vector<16x384xf32> to vector<16x64xf32>
    %92 = vector.extract_strided_slice %70 {offsets = [0, 192], sizes = [16, 64], strides = [1, 1]} : vector<16x384xf32> to vector<16x64xf32>
    %93 = vector.extract_strided_slice %70 {offsets = [0, 320], sizes = [16, 64], strides = [1, 1]} : vector<16x384xf32> to vector<16x64xf32>
    %94 = arith.truncf %91 : vector<16x64xf32> to vector<16x64xbf16>
    %95 = arith.truncf %92 : vector<16x64xf32> to vector<16x64xbf16>
    %cst_29 = arith.constant dense<0.000000e+00> : vector<16x16xf32>
    %96 = tpu.matmul %94, %95, %cst_29 {dimension_numbers = #tpu.dot_dimension_numbers<[1], [1], [0], [0], [0, 0, 1, 0], [], []>} : vector<16x64xbf16>, vector<16x64xbf16>, vector<16x16xf32> -> vector<16x16xf32>
    %cst_30 = arith.constant dense<0xFF800000> : vector<16xf32>
    %97 = vector.multi_reduction <maximumf>, %96, %cst_30 [1] : vector<16x16xf32> to vector<16xf32>
    %98 = vector.shape_cast %97 : vector<16xf32> to vector<16x1xf32>
    %99 = vector.broadcast %98 : vector<16x1xf32> to vector<16x16xf32>
    %100 = arith.subf %96, %99 : vector<16x16xf32>
    %101 = math.exp %100 : vector<16x16xf32>
    %cst_31 = arith.constant dense<0.000000e+00> : vector<16xf32>
    %102 = vector.multi_reduction <add>, %101, %cst_31 [1] : vector<16x16xf32> to vector<16xf32>
    %103 = vector.shape_cast %102 : vector<16xf32> to vector<16x1xf32>
    %104 = tpu.reciprocal %103 {approx = true} : vector<16x1xf32> -> vector<16x1xf32>
    %105 = vector.broadcast %104 : vector<16x1xf32> to vector<16x16xf32>
    %106 = arith.mulf %101, %105 : vector<16x16xf32>
    %107 = arith.truncf %106 : vector<16x16xf32> to vector<16x16xbf16>
    %108 = arith.truncf %93 : vector<16x64xf32> to vector<16x64xbf16>
    %cst_32 = arith.constant dense<0.000000e+00> : vector<16x64xf32>
    %109 = tpu.matmul %107, %108, %cst_32 {dimension_numbers = #tpu.dot_dimension_numbers<[1], [0], [0], [1], [0, 0, 1, 1], [], []>} : vector<16x16xbf16>, vector<16x64xbf16>, vector<16x64xf32> -> vector<16x64xf32>
    %c16_33 = arith.constant 16 : index
    %c64_34 = arith.constant 64 : index
    %110 = vector.load %arg8[%c16_33, %c64_34] : memref<32x128xf32, #tpu.memory_space<vmem>>, vector<16x64xf32>
    tpu.vector_store %arg8[%c16_33, %c64_34], %109 {strides = array<i32>} : memref<32x128xf32, #tpu.memory_space<vmem>>, vector<16x64xf32>,
    %c0_35 = arith.constant 0 : index
    %c0_36 = arith.constant 0 : index
    %111 = vector.load %arg8[%c0_35, %c0_36] : memref<32x128xf32, #tpu.memory_space<vmem>>, vector<32x128xf32>
    %112 = arith.truncf %111 : vector<32x128xf32> to vector<32x128xbf16>
    %c0_37 = arith.constant 0 : index
    %c0_38 = arith.constant 0 : index
    %113 = vector.load %arg5[%c0_37, %c0_38] : memref<128x128xbf16, #tpu.memory_space<vmem>>, vector<128x128xbf16>
    %cst_39 = arith.constant dense<0.000000e+00> : vector<32x128xf32>
    %114 = tpu.matmul %112, %113, %cst_39 {dimension_numbers = #tpu.dot_dimension_numbers<[1], [0], [0], [1], [0, 0, 1, 1], [], []>} : vector<32x128xbf16>, vector<128x128xbf16>, vector<32x128xf32> -> vector<32x128xf32>
    %c0_40 = arith.constant 0 : index
    %c0_41 = arith.constant 0 : index
    %115 = vector.load %arg6[%c0_40, %c0_41] : memref<1x128xf32, #tpu.memory_space<vmem>>, vector<1x128xf32>
    %116 = vector.broadcast %115 : vector<1x128xf32> to vector<32x128xf32>
    %117 = arith.addf %114, %116 : vector<32x128xf32>
    %118 = vector.shape_cast %117 : vector<32x128xf32> to vector<2x16x128xf32>
    %c0_42 = arith.constant 0 : index
    %c0_43 = arith.constant 0 : index
    %c0_44 = arith.constant 0 : index
    %119 = vector.load %arg7[%c0_42, %c0_43, %c0_44] : memref<2x16x128xf32, #tpu.memory_space<vmem>>, vector<2x16x128xf32>
    tpu.vector_store %arg7[%c0_42, %c0_43, %c0_44], %118 {strides = array<i32>} : memref<2x16x128xf32, #tpu.memory_space<vmem>>, vector<2x16x128xf32>,
    return
  }
  func.func @transform_0(%arg0: i32) -> (i32, i32, i32) {
    %c0_i32 = arith.constant 0 : i32
    %c0_i32_0 = arith.constant 0 : i32
    %c0_i32_1 = arith.constant 0 : i32
    return %arg0, %c0_i32, %c0_i32_0 : i32, i32, i32
  }
  func.func @transform_1(%arg0: i32) -> (i32, i32) {
    %c0_i32 = arith.constant 0 : i32
    %c0_i32_0 = arith.constant 0 : i32
    %c0_i32_1 = arith.constant 0 : i32
    return %c0_i32, %c0_i32_0 : i32, i32
  }
  func.func @transform_2(%arg0: i32) -> (i32, i32) {
    %c0_i32 = arith.constant 0 : i32
    %c0_i32_0 = arith.constant 0 : i32
    %c0_i32_1 = arith.constant 0 : i32
    return %c0_i32, %c0_i32_0 : i32, i32
  }
  func.func @transform_3(%arg0: i32) -> (i32, i32) {
    %c0_i32 = arith.constant 0 : i32
    %c0_i32_0 = arith.constant 0 : i32
    %c0_i32_1 = arith.constant 0 : i32
    return %c0_i32, %c0_i32_0 : i32, i32
  }
  func.func @transform_4(%arg0: i32) -> (i32, i32) {
    %c0_i32 = arith.constant 0 : i32
    %c0_i32_0 = arith.constant 0 : i32
    %c0_i32_1 = arith.constant 0 : i32
    return %c0_i32, %c0_i32_0 : i32, i32
  }
  func.func @transform_5(%arg0: i32) -> (i32, i32) {
    %c0_i32 = arith.constant 0 : i32
    %c0_i32_0 = arith.constant 0 : i32
    %c0_i32_1 = arith.constant 0 : i32
    return %c0_i32, %c0_i32_0 : i32, i32
  }
  func.func @transform_6(%arg0: i32) -> (i32, i32, i32) {
    %c0_i32 = arith.constant 0 : i32
    %c0_i32_0 = arith.constant 0 : i32
    %c0_i32_1 = arith.constant 0 : i32
    return %arg0, %c0_i32, %c0_i32_0 : i32, i32, i32
  }
}

</mosaic_0001>

<llo_original>
// kernel: tpu_custom_call.1
$region0: #{tpu_custom_call.1}
  #allocation0 [shape = 'u32[]', space=smem, size = 0x4, offset = 0x4, fixed_abs, tag = 'smem constant byte address 0x4 - core index']
  #allocation1 [shape = 'u32[72,128]{1,0:T(1,128)}', space=vmem, size = 0x9000, scoped, tag = 'internal scratch']
  #allocation2 [shape = 'f32[32,128]{1,0:T(8,128)}', space=vmem, size = 0x4000, scoped, tag = 'scratch operand']
  %s0 = inlined_call_operand.hbm [shape: f32[2,16,128], index: 0, kind: input, shape index: {}]
  %s1 = inlined_call_operand.hbm [shape: f32[1,128], index: 1, kind: input, shape index: {}]
  %s2 = inlined_call_operand.vmem [shape: f32[1,128], index: 2, kind: input, shape index: {}]
  %s3 = inlined_call_operand.hbm [shape: bf16[128,384], index: 3, kind: input, shape index: {}]
  %s4 = inlined_call_operand.hbm [shape: bf16[128,128], index: 4, kind: input, shape index: {}]
  %s5 = inlined_call_operand.vmem [shape: f32[1,128], index: 5, kind: input, shape index: {}]
  %s6 = inlined_call_operand.hbm [shape: f32[2,16,128], index: 6, kind: output, shape index: {}]
  %s7 = sld [smem:[#allocation0]]
  $region50: #{tpu_custom_call.1} parent=0
    _
  %s9 = ssub.s32 1, %s7
  %s10 = scalar_select 0, %s9, %s7
  $region1: #{tpu_custom_call.1} parent=0
    #allocation3 [shape = 'u8[16384]{0}', space=vmem, size = 0x4000, scoped, tag = 'input window, operand 0, single buffered']
    #allocation4 [shape = 's32[1]{0}', space=sflag, size = 0x4, scoped, tag = 'scoped memory for tpu_custom_call.1']
    #allocation5 [shape = 's32[1]{0}', space=sflag, size = 0x4, scoped, tag = 'scoped memory for tpu_custom_call.1']
    #allocation6 [shape = 'u8[512]{0}', space=vmem, size = 0x400, scoped, tag = 'input window, operand 1, single buffered']
    #allocation7 [shape = 's32[1]{0}', space=sflag, size = 0x4, scoped, tag = 'scoped memory for tpu_custom_call.1']
    #allocation8 [shape = 'u8[98304]{0}', space=vmem, size = 0x18000, scoped, tag = 'input window, operand 3, single buffered']
    #allocation9 [shape = 'u8[32768]{0}', space=vmem, size = 0x8000, scoped, tag = 'input window, operand 4, single buffered']
    #allocation10 [shape = 's32[1]{0}', space=sflag, size = 0x4, scoped, tag = 'scoped memory for tpu_custom_call.1']
    #allocation11 [shape = 'u8[16384]{0}', space=vmem, size = 0x4000, scoped, tag = 'output window, operand 0, single buffered']
    %11 = vsyncpa [#allocation4], 0
    %12 = vsyncpa [#allocation7], 0
    %13 = vsyncpa [#allocation10], 0
    %14 = vsyncpa [#allocation5], 0
    // Predicated region
    $region2: #{tpu_custom_call.1} parent=1 // pred_check
      _
    $region3: #{tpu_custom_call.1} parent=1 // pred_check_branch
      %16 = sbr.rel (0) target = $region5
    $region4: #{tpu_custom_call.1} parent=1 // pred_region
      %18 = vsyncadd [#allocation4], 0
      %s19 = sshll.u32 %s0, 4
      %s20 = int_to_ptr.hbm [resolvable:$true] %s19
      %s21 = sshll.u32 [#allocation3], 4
      %s22 = int_to_ptr.vmem [resolvable:$true] %s21
      %27 = dma.hbm_to_vmem [thread:$0]  %s20, 512, %s22, [#allocation4], 128, 128, 8
    $region5: #{tpu_custom_call.1} parent=1 // pred_fallthru
      _
    // Predicated region
    $region6: #{tpu_custom_call.1} parent=1 // pred_check
      _
    $region7: #{tpu_custom_call.1} parent=1 // pred_check_branch
      %29 = sbr.rel (0) target = $region9
    $region8: #{tpu_custom_call.1} parent=1 // pred_region
      %31 = vsyncadd [#allocation7], 0
      %s33 = sshll.u32 %s1, 4
      %s34 = int_to_ptr.hbm [resolvable:$true] %s33
      %s35 = sshll.u32 [#allocation6], 4
      %s36 = int_to_ptr.vmem [resolvable:$true] %s35
      %38 = dma.hbm_to_vmem [thread:$0]  %s34, 16, %s36, [#allocation7]
    $region9: #{tpu_custom_call.1} parent=1 // pred_fallthru
      _
    // Predicated region
    $region10: #{tpu_custom_call.1} parent=1 // pred_check
      _
    $region11: #{tpu_custom_call.1} parent=1 // pred_check_branch
      %40 = sbr.rel (0) target = $region13
    $region12: #{tpu_custom_call.1} parent=1 // pred_region
      _
    $region13: #{tpu_custom_call.1} parent=1 // pred_fallthru
      _
    // Predicated region
    $region14: #{tpu_custom_call.1} parent=1 // pred_check
      _
    $region15: #{tpu_custom_call.1} parent=1 // pred_check_branch
      %42 = sbr.rel (0) target = $region17
    $region16: #{tpu_custom_call.1} parent=1 // pred_region
      %44 = vsyncadd [#allocation7], 0
      %s45 = sshll.u32 %s3, 4
      %s46 = int_to_ptr.hbm [resolvable:$true] %s45
      %s47 = sshll.u32 [#allocation8], 4
      %s48 = int_to_ptr.vmem [resolvable:$true] %s47
      %53 = dma.hbm_to_vmem [thread:$0]  %s46, 3072, %s48, [#allocation7], 192, 192, 12
    $region17: #{tpu_custom_call.1} parent=1 // pred_fallthru
      _
    // Predicated region
    $region18: #{tpu_custom_call.1} parent=1 // pred_check
      _
    $region19: #{tpu_custom_call.1} parent=1 // pred_check_branch
      %55 = sbr.rel (0) target = $region21
    $region20: #{tpu_custom_call.1} parent=1 // pred_region
      %57 = vsyncadd [#allocation10], 0
      %s58 = sshll.u32 %s4, 4
      %s59 = int_to_ptr.hbm [resolvable:$true] %s58
      %s60 = sshll.u32 [#allocation9], 4
      %s61 = int_to_ptr.vmem [resolvable:$true] %s60
      %66 = dma.hbm_to_vmem [thread:$0]  %s59, 1024, %s61, [#allocation10], 64, 64, 4
    $region21: #{tpu_custom_call.1} parent=1 // pred_fallthru
      _
    // Predicated region
    $region22: #{tpu_custom_call.1} parent=1 // pred_check
      _
    $region23: #{tpu_custom_call.1} parent=1 // pred_check_branch
      %68 = sbr.rel (0) target = $region25
    $region24: #{tpu_custom_call.1} parent=1 // pred_region
      _
    $region25: #{tpu_custom_call.1} parent=1 // pred_fallthru
      _
    // Predicated region
    $region26: #{tpu_custom_call.1} parent=1 // pred_check
      _
    $region27: #{tpu_custom_call.1} parent=1 // pred_check_branch
      %70 = sbr.rel (0) target = $region29
    $region28: #{tpu_custom_call.1} parent=1 // pred_region
      %72 = dma.done [#allocation4], 512
    $region29: #{tpu_custom_call.1} parent=1 // pred_fallthru
      _
    // Predicated region
    $region30: #{tpu_custom_call.1} parent=1 // pred_check
      _
    $region31: #{tpu_custom_call.1} parent=1 // pred_check_branch
      %74 = sbr.rel (0) target = $region33
    $region32: #{tpu_custom_call.1} parent=1 // pred_region
      %76 = dma.done [#allocation7], 16
    $region33: #{tpu_custom_call.1} parent=1 // pred_fallthru
      _
    // Predicated region
    $region34: #{tpu_custom_call.1} parent=1 // pred_check
      _
    $region35: #{tpu_custom_call.1} parent=1 // pred_check_branch
      %78 = sbr.rel (0) target = $region37
    $region36: #{tpu_custom_call.1} parent=1 // pred_region
      %80 = dma.done [#allocation7], 3072
    $region37: #{tpu_custom_call.1} parent=1 // pred_fallthru
      _
    // Predicated region
    $region38: #{tpu_custom_call.1} parent=1 // pred_check
      _
    $region39: #{tpu_custom_call.1} parent=1 // pred_check_branch
      %82 = sbr.rel (0) target = $region41
    $region40: #{tpu_custom_call.1} parent=1 // pred_region
      %84 = dma.done [#allocation10], 1024
    $region41: #{tpu_custom_call.1} parent=1 // pred_fallthru
      _
    %v86 = vld [vmem:[#allocation3] sm:$0xff]
    %v87 = vld [vmem:[#allocation3 + $0x8] sm:$0xff]
    %v88 = vld [vmem:[#allocation3 + $0x10] sm:$0xff]
    %v89 = vld [vmem:[#allocation3 + $0x18] sm:$0xff]
    %90 = vadd.xlane.f32.xlu0 %v86
    %v91 = vpop.xlane.xlu0 %90
    %92 = vadd.xlane.f32.xlu0 %v87
    %v93 = vpop.xlane.xlu0 %92
    %94 = vadd.xlane.f32.xlu0 %v88
    %v95 = vpop.xlane.xlu0 %94
    %96 = vadd.xlane.f32.xlu0 %v89
    %v97 = vpop.xlane.xlu0 %96
    %v98 = vrcp.pop 128.0
    %v99 = vmul.f32 128.0, %v98
    %v100 = vsub.f32 1.0, %v99
    %v101 = vmul.f32 %v98, %v100
    %v102 = vadd.f32 %v98, %v101
    %vm103 = vweird.f32 %v98
    %v104 = vsel %vm103, %v98, %v102
    %v105 = vmul.f32 %v91, %v104
    %v106 = vmul.f32 %v93, %v104
    %v107 = vmul.f32 %v95, %v104
    %v108 = vmul.f32 %v97, %v104
    %v109 = vsub.f32 %v86, %v105
    %v110 = vsub.f32 %v87, %v106
    %v111 = vsub.f32 %v88, %v107
    %v112 = vsub.f32 %v89, %v108
    %v113 = vmul.f32 %v109, %v109
    %v114 = vmul.f32 %v110, %v110
    %v115 = vmul.f32 %v111, %v111
    %v116 = vmul.f32 %v112, %v112
    %117 = vadd.xlane.f32.xlu0 %v113
    %v118 = vpop.xlane.xlu0 %117
    %119 = vadd.xlane.f32.xlu0 %v114
    %v120 = vpop.xlane.xlu0 %119
    %121 = vadd.xlane.f32.xlu0 %v115
    %v122 = vpop.xlane.xlu0 %121
    %123 = vadd.xlane.f32.xlu0 %v116
    %v124 = vpop.xlane.xlu0 %123
    %v125 = vmul.f32 %v118, %v104
    %v126 = vmul.f32 %v120, %v104
    %v127 = vmul.f32 %v122, %v104
    %v128 = vmul.f32 %v124, %v104
    %v129 = vadd.f32 %v125, 1e-05
    %v130 = vadd.f32 %v126, 1e-05
    %v131 = vadd.f32 %v127, 1e-05
    %v132 = vadd.f32 %v128, 1e-05
    %v133 = vrsqrt.pop %v129
    %v134 = vmul.f32 %v133, %v129
    %v135 = vmul.f32 %v134, %v133
    %v136 = vmul.f32 0.5, %v135
    %v137 = vsub.f32 1.5, %v136
    %v138 = vmul.f32 %v133, %v137
    %vm139 = vweird.f32 %v129
    %vm140 = vweird.f32 %v133
    %vm141 = vmor %vm139, %vm140
    %v142 = vsel %vm141, %v133, %v138
    %v143 = vrsqrt.pop %v130
    %v144 = vmul.f32 %v143, %v130
    %v145 = vmul.f32 %v144, %v143
    %v146 = vmul.f32 0.5, %v145
    %v147 = vsub.f32 1.5, %v146
    %v148 = vmul.f32 %v143, %v147
    %vm149 = vweird.f32 %v130
    %vm150 = vweird.f32 %v143
    %vm151 = vmor %vm149, %vm150
    %v152 = vsel %vm151, %v143, %v148
    %v153 = vrsqrt.pop %v131
    %v154 = vmul.f32 %v153, %v131
    %v155 = vmul.f32 %v154, %v153
    %v156 = vmul.f32 0.5, %v155
    %v157 = vsub.f32 1.5, %v156
    %v158 = vmul.f32 %v153, %v157
    %vm159 = vweird.f32 %v131
    %vm160 = vweird.f32 %v153
    %vm161 = vmor %vm159, %vm160
    %v162 = vsel %vm161, %v153, %v158
    %v163 = vrsqrt.pop %v132
    %v164 = vmul.f32 %v163, %v132
    %v165 = vmul.f32 %v164, %v163
    %v166 = vmul.f32 0.5, %v165
    %v167 = vsub.f32 1.5, %v166
    %v168 = vmul.f32 %v163, %v167
    %vm169 = vweird.f32 %v132
    %vm170 = vweird.f32 %v163
    %vm171 = vmor %vm169, %vm170
    %v172 = vsel %vm171, %v163, %v168
    %v173 = vmul.f32 %v109, %v142
    %v174 = vmul.f32 %v110, %v152
    %v175 = vmul.f32 %v111, %v162
    %v176 = vmul.f32 %v112, %v172
    %v177 = vld [vmem:[#allocation6] sm:$0x1]
    %v179 = vperm.slane %v177, 0
    %v181 = vmul.f32 %v173, %v179
    %v182 = vmul.f32 %v174, %v179
    %v183 = vmul.f32 %v175, %v179
    %v184 = vmul.f32 %v176, %v179
    %v185 = vld [vmem:[%s2] sm:$0x1]
    %v187 = vperm.slane %v185, 0
    %v189 = vadd.f32 %v181, %v187
    %v190 = vadd.f32 %v182, %v187
    %v191 = vadd.f32 %v183, %v187
    %v192 = vadd.f32 %v184, %v187
    %v193 = vpack.c.bf16 %v190, %v189
    %v194 = vpack.c.bf16 %v192, %v191
    %v195 = vld [vmem:[#allocation8] sm:$0xff]
    %v196 = vld [vmem:[#allocation8 + $0x8] sm:$0xf]
    %v197 = vld [vmem:[#allocation8 + $0xc] sm:$0xff]
    %v198 = vld [vmem:[#allocation8 + $0x14] sm:$0xf]
    %v199 = vld [vmem:[#allocation8 + $0x18] sm:$0xff]
    %v200 = vld [vmem:[#allocation8 + $0x20] sm:$0xf]
    %v201 = vld [vmem:[#allocation8 + $0x24] sm:$0xff]
    %v202 = vld [vmem:[#allocation8 + $0x2c] sm:$0xf]
    %v203 = vld [vmem:[#allocation8 + $0x30] sm:$0xff]
    %v204 = vld [vmem:[#allocation8 + $0x38] sm:$0xf]
    %v205 = vld [vmem:[#allocation8 + $0x3c] sm:$0xff]
    %v206 = vld [vmem:[#allocation8 + $0x44] sm:$0xf]
    %v207 = vld [vmem:[#allocation8 + $0x48] sm:$0xff]
    %v208 = vld [vmem:[#allocation8 + $0x50] sm:$0xf]
    %v209 = vld [vmem:[#allocation8 + $0x54] sm:$0xff]
    %v210 = vld [vmem:[#allocation8 + $0x5c] sm:$0xf]
    %v211 = vld [vmem:[#allocation8 + $0x60] sm:$0xff]
    %v212 = vld [vmem:[#allocation8 + $0x68] sm:$0xf]
    %v213 = vld [vmem:[#allocation8 + $0x6c] sm:$0xff]
    %v214 = vld [vmem:[#allocation8 + $0x74] sm:$0xf]
    %v215 = vld [vmem:[#allocation8 + $0x78] sm:$0xff]
    %v216 = vld [vmem:[#allocation8 + $0x80] sm:$0xf]
    %v217 = vld [vmem:[#allocation8 + $0x84] sm:$0xff]
    %v218 = vld [vmem:[#allocation8 + $0x8c] sm:$0xf]
    %v219 = vld [vmem:[#allocation8 + $0x90] sm:$0xff]
    %v220 = vld [vmem:[#allocation8 + $0x98] sm:$0xf]
    %v221 = vld [vmem:[#allocation8 + $0x9c] sm:$0xff]
    %v222 = vld [vmem:[#allocation8 + $0xa4] sm:$0xf]
    %v223 = vld [vmem:[#allocation8 + $0xa8] sm:$0xff]
    %v224 = vld [vmem:[#allocation8 + $0xb0] sm:$0xf]
    %v225 = vld [vmem:[#allocation8 + $0xb4] sm:$0xff]
    %v226 = vld [vmem:[#allocation8 + $0xbc] sm:$0xf]
    %v259 = vunpack.c.l.b16 %v195
    %v260 = vunpack.c.h.b16 %v195
    %v261 = vunpack.c.l.b16 %v196
    %v262 = vunpack.c.l.b16 %v197
    %v263 = vunpack.c.h.b16 %v197
    %v264 = vunpack.c.l.b16 %v198
    %v265 = vunpack.c.l.b16 %v199
    %v266 = vunpack.c.h.b16 %v199
    %v267 = vunpack.c.l.b16 %v200
    %v268 = vunpack.c.l.b16 %v201
    %v269 = vunpack.c.h.b16 %v201
    %v270 = vunpack.c.l.b16 %v202
    %v271 = vunpack.c.l.b16 %v203
    %v272 = vunpack.c.h.b16 %v203
    %v273 = vunpack.c.l.b16 %v204
    %v274 = vunpack.c.l.b16 %v205
    %v275 = vunpack.c.h.b16 %v205
    %v276 = vunpack.c.l.b16 %v206
    %v277 = vunpack.c.l.b16 %v207
    %v278 = vunpack.c.h.b16 %v207
    %v279 = vunpack.c.l.b16 %v208
    %v280 = vunpack.c.l.b16 %v209
    %v281 = vunpack.c.h.b16 %v209
    %v282 = vunpack.c.l.b16 %v210
    %v283 = vunpack.c.l.b16 %v211
    %v284 = vunpack.c.h.b16 %v211
    %v285 = vunpack.c.l.b16 %v212
    %v286 = vunpack.c.l.b16 %v213
    %v287 = vunpack.c.h.b16 %v213
    %v288 = vunpack.c.l.b16 %v214
    %v289 = vunpack.c.l.b16 %v215
    %v290 = vunpack.c.h.b16 %v215
    %v291 = vunpack.c.l.b16 %v216
    %v292 = vunpack.c.l.b16 %v217
    %v293 = vunpack.c.h.b16 %v217
    %v294 = vunpack.c.l.b16 %v218
    %v295 = vunpack.c.l.b16 %v219
    %v296 = vunpack.c.h.b16 %v219
    %v297 = vunpack.c.l.b16 %v220
    %v298 = vunpack.c.l.b16 %v221
    %v299 = vunpack.c.h.b16 %v221
    %v300 = vunpack.c.l.b16 %v222
    %v301 = vunpack.c.l.b16 %v223
    %v302 = vunpack.c.h.b16 %v223
    %v303 = vunpack.c.l.b16 %v224
    %v304 = vunpack.c.l.b16 %v225
    %v305 = vunpack.c.h.b16 %v225
    %v306 = vunpack.c.l.b16 %v226
    %v307 = vpack.c.b16 %v262, %v259
    %v308 = vpack.c.b16 %v263, %v260
    %v309 = vpack.c.b16 %v264, %v261
    %v310 = vpack.c.b16 %v268, %v265
    %v311 = vpack.c.b16 %v269, %v266
    %v312 = vpack.c.b16 %v270, %v267
    %v313 = vpack.c.b16 %v274, %v271
    %v314 = vpack.c.b16 %v275, %v272
    %v315 = vpack.c.b16 %v276, %v273
    %v316 = vpack.c.b16 %v280, %v277
    %v317 = vpack.c.b16 %v281, %v278
    %v318 = vpack.c.b16 %v282, %v279
    %v319 = vpack.c.b16 %v286, %v283
    %v320 = vpack.c.b16 %v287, %v284
    %v321 = vpack.c.b16 %v288, %v285
    %v322 = vpack.c.b16 %v292, %v289
    %v323 = vpack.c.b16 %v293, %v290
    %v324 = vpack.c.b16 %v294, %v291
    %v325 = vpack.c.b16 %v298, %v295
    %v326 = vpack.c.b16 %v299, %v296
    %v327 = vpack.c.b16 %v300, %v297
    %v328 = vpack.c.b16 %v304, %v301
    %v329 = vpack.c.b16 %v305, %v302
    %v330 = vpack.c.b16 %v306, %v303
    %355 = vmatpush.bf16.msra.mxu0 %v328
    %356 = vmatpush.bf16.msra.mxu0 %v325
    %357 = vmatpush.bf16.msra.mxu0 %v322
    %358 = vmatpush.bf16.msra.mxu0 %v319
    %359 = vmatpush.bf16.msra.mxu0 %v316
    %360 = vmatpush.bf16.msra.mxu0 %v313
    %361 = vmatpush.bf16.msra.mxu0 %v310
    %362 = vmatpush.bf16.msra.mxu0 %v307
    %363 = vmatmul.bf16.gmra.mxu0 %v193
    %v364 = vpop.f32.mrf.mxu0
    %v365 = vadd.f32 0.0, %v364
    %v366 = vpop.f32.mrf.mxu0
    %v367 = vadd.f32 0.0, %v366
    %368 = vmatmul.bf16.gmra.mxu0 %v194
    %v369 = vpop.f32.mrf.mxu0
    %v370 = vadd.f32 0.0, %v369
    %v371 = vpop.f32.mrf.mxu0
    %v372 = vadd.f32 0.0, %v371
    %373 = vdwg.mxu0
    %374 = vmatpush.bf16.msra.mxu0 %v329
    %375 = vmatpush.bf16.msra.mxu0 %v326
    %376 = vmatpush.bf16.msra.mxu0 %v323
    %377 = vmatpush.bf16.msra.mxu0 %v320
    %378 = vmatpush.bf16.msra.mxu0 %v317
    %379 = vmatpush.bf16.msra.mxu0 %v314
    %380 = vmatpush.bf16.msra.mxu0 %v311
    %381 = vmatpush.bf16.msra.mxu0 %v308
    %382 = vmatmul.bf16.gmra.mxu0 %v193
    %v383 = vpop.f32.mrf.mxu0
    %v384 = vadd.f32 0.0, %v383
    %v385 = vpop.f32.mrf.mxu0
    %v386 = vadd.f32 0.0, %v385
    %387 = vmatmul.bf16.gmra.mxu0 %v194
    %v388 = vpop.f32.mrf.mxu0
    %v389 = vadd.f32 0.0, %v388
    %v390 = vpop.f32.mrf.mxu0
    %v391 = vadd.f32 0.0, %v390
    %392 = vdwg.mxu0
    %393 = vmatpush.bf16.msra.mxu0 %v330
    %394 = vmatpush.bf16.msra.mxu0 %v327
    %395 = vmatpush.bf16.msra.mxu0 %v324
    %396 = vmatpush.bf16.msra.mxu0 %v321
    %397 = vmatpush.bf16.msra.mxu0 %v318
    %398 = vmatpush.bf16.msra.mxu0 %v315
    %399 = vmatpush.bf16.msra.mxu0 %v312
    %400 = vmatpush.bf16.msra.mxu0 %v309
    %401 = vmatmul.bf16.gmra.mxu0 %v193
    %v402 = vpop.f32.mrf.mxu0
    %v403 = vadd.f32 0.0, %v402
    %v404 = vpop.f32.mrf.mxu0
    %v405 = vadd.f32 0.0, %v404
    %406 = vmatmul.bf16.gmra.mxu0 %v194
    %v407 = vpop.f32.mrf.mxu0
    %v408 = vadd.f32 0.0, %v407
    %v409 = vpop.f32.mrf.mxu0
    %v410 = vadd.f32 0.0, %v409
    %411 = vdwg.mxu0
    %v412 = vpack.c.bf16 %v367, %v365
    %v413 = vpack.c.bf16 %v386, %v384
    %vm414 = vcmask 523264
    %v416 = vsel %vm414, %v412, 0
    %v419 = vsel %vm414, %v413, 0
    %421 = vmatpush.bf16.xpose.msra.mxu0 0
    %422 = vmatpush.bf16.xpose.msra.mxu0 0
    %423 = vmatpush.bf16.xpose.msra.mxu0 0
    %424 = vmatpush.bf16.xpose.msra.mxu0 0
    %425 = vmatpush.bf16.xpose.msra.mxu0 0
    %426 = vmatpush.bf16.xpose.msra.mxu0 0
    %427 = vmatpush.bf16.xpose.msra.mxu0 0
    %428 = vmatpush.bf16.xpose.msra.mxu0 %v419
    %429 = vmatmul.bf16.gmra.mxu0 %v416
    %v430 = vpop.f32.mrf.mxu0
    %v431 = vadd.f32 0.0, %v430
    %v432 = vpop.f32.mrf.mxu0
    %v433 = vadd.f32 0.0, %v432
    %434 = vdwg.mxu0
    %vm435 = vcmask 130048
    %v436 = vsel %vm435, %v431, -inf
    %437 = vmax.xlane.f32.xlu0 %v436
    %v438 = vpop.xlane.xlu0 %437
    %v439 = vsel %vm435, %v433, -inf
    %440 = vmax.xlane.f32.xlu0 %v439
    %v441 = vpop.xlane.xlu0 %440
    %v442 = vsub.f32 %v431, %v438
    %v443 = vsub.f32 %v433, %v441
    %v444 = vmul.f32 %v442, 1.442695
    %v445 = vpow.pop %v444
    %v446 = vmul.f32 %v443, 1.442695
    %v447 = vpow.pop %v446
    %v448 = vsel %vm435, %v445, 0.0
    %449 = vadd.xlane.f32.xlu0 %v448
    %v450 = vpop.xlane.xlu0 %449
    %v451 = vsel %vm435, %v447, 0.0
    %452 = vadd.xlane.f32.xlu0 %v451
    %v453 = vpop.xlane.xlu0 %452
    %v454 = vrcp.pop %v450
    %v455 = vrcp.pop %v453
    %v456 = vmul.f32 %v445, %v454
    %v457 = vmul.f32 %v447, %v455
    %v458 = vpack.c.bf16 %v457, %v456
    %v459 = vpack.c.bf16 %v405, %v403
    %v461 = vsel %vm435, %v458, 0
    %463 = vmatpush.bf16.msra.mxu0 0
    %464 = vmatpush.bf16.msra.mxu0 0
    %465 = vmatpush.bf16.msra.mxu0 0
    %466 = vmatpush.bf16.msra.mxu0 0
    %467 = vmatpush.bf16.msra.mxu0 0
    %468 = vmatpush.bf16.msra.mxu0 0
    %469 = vmatpush.bf16.msra.mxu0 0
    %470 = vmatpush.bf16.msra.mxu0 %v459
    %471 = vmatmul.bf16.gmra.mxu0 %v461
    %v472 = vpop.f32.mrf.mxu0
    %v473 = vadd.f32 0.0, %v472
    %v474 = vpop.f32.mrf.mxu0
    %v475 = vadd.f32 0.0, %v474
    %476 = vdwg.mxu0
    %477 = vst.msk [vmem:[#allocation2] sm:$0xff] %vm414, %v473
    %478 = vst.msk [vmem:[#allocation2 + $0x8] sm:$0xff] %vm414, %v475
    %480 = vrot.lane.b32.xlu0 %v412, 64
    %v481 = vpop.permute.xlu0 %480
    %483 = vrot.lane.b32.xlu0 %v413, 64
    %v484 = vpop.permute.xlu0 %483
    %v486 = vsel %vm414, %v481, 0
    %v489 = vsel %vm414, %v484, 0
    %491 = vmatpush.bf16.xpose.msra.mxu0 0
    %492 = vmatpush.bf16.xpose.msra.mxu0 0
    %493 = vmatpush.bf16.xpose.msra.mxu0 0
    %494 = vmatpush.bf16.xpose.msra.mxu0 0
    %495 = vmatpush.bf16.xpose.msra.mxu0 0
    %496 = vmatpush.bf16.xpose.msra.mxu0 0
    %497 = vmatpush.bf16.xpose.msra.mxu0 0
    %498 = vmatpush.bf16.xpose.msra.mxu0 %v489
    %499 = vmatmul.bf16.gmra.mxu0 %v486
    %v500 = vpop.f32.mrf.mxu0
    %v501 = vadd.f32 0.0, %v500
    %v502 = vpop.f32.mrf.mxu0
    %v503 = vadd.f32 0.0, %v502
    %504 = vdwg.mxu0
    %v505 = vsel %vm435, %v501, -inf
    %506 = vmax.xlane.f32.xlu0 %v505
    %v507 = vpop.xlane.xlu0 %506
    %v508 = vsel %vm435, %v503, -inf
    %509 = vmax.xlane.f32.xlu0 %v508
    %v510 = vpop.xlane.xlu0 %509
    %v511 = vsub.f32 %v501, %v507
    %v512 = vsub.f32 %v503, %v510
    %v513 = vmul.f32 %v511, 1.442695
    %v514 = vpow.pop %v513
    %v515 = vmul.f32 %v512, 1.442695
    %v516 = vpow.pop %v515
    %v517 = vsel %vm435, %v514, 0.0
    %518 = vadd.xlane.f32.xlu0 %v517
    %v519 = vpop.xlane.xlu0 %518
    %v520 = vsel %vm435, %v516, 0.0
    %521 = vadd.xlane.f32.xlu0 %v520
    %v522 = vpop.xlane.xlu0 %521
    %v523 = vrcp.pop %v519
    %v524 = vrcp.pop %v522
    %v525 = vmul.f32 %v514, %v523
    %v526 = vmul.f32 %v516, %v524
    %v527 = vpack.c.bf16 %v526, %v525
    %529 = vrot.lane.b32.xlu0 %v459, 64
    %v530 = vpop.permute.xlu0 %529
    %v533 = vsel %vm435, %v527, 0
    %535 = vmatpush.bf16.msra.mxu0 0
    %536 = vmatpush.bf16.msra.mxu0 0
    %537 = vmatpush.bf16.msra.mxu0 0
    %538 = vmatpush.bf16.msra.mxu0 0
    %539 = vmatpush.bf16.msra.mxu0 0
    %540 = vmatpush.bf16.msra.mxu0 0
    %541 = vmatpush.bf16.msra.mxu0 0
    %542 = vmatpush.bf16.msra.mxu0 %v530
    %543 = vmatmul.bf16.gmra.mxu0 %v533
    %v544 = vpop.f32.mrf.mxu0
    %v545 = vadd.f32 0.0, %v544
    %v546 = vpop.f32.mrf.mxu0
    %v547 = vadd.f32 0.0, %v546
    %548 = vdwg.mxu0
    %551 = vrot.lane.b32.xlu0 %v545, 64
    %v552 = vpop.permute.xlu0 %551
    %553 = vrot.lane.b32.xlu0 %v547, 64
    %v554 = vpop.permute.xlu0 %553
    %vm557 = vcmask 1048064
    %558 = vst.msk [vmem:[#allocation2] sm:$0xff] %vm557, %v552
    %559 = vst.msk [vmem:[#allocation2 + $0x8] sm:$0xff] %vm557, %v554
    %v560 = vpack.c.bf16 %v372, %v370
    %v561 = vpack.c.bf16 %v391, %v389
    %v563 = vsel %vm414, %v560, 0
    %v566 = vsel %vm414, %v561, 0
    %568 = vmatpush.bf16.xpose.msra.mxu0 0
    %569 = vmatpush.bf16.xpose.msra.mxu0 0
    %570 = vmatpush.bf16.xpose.msra.mxu0 0
    %571 = vmatpush.bf16.xpose.msra.mxu0 0
    %572 = vmatpush.bf16.xpose.msra.mxu0 0
    %573 = vmatpush.bf16.xpose.msra.mxu0 0
    %574 = vmatpush.bf16.xpose.msra.mxu0 0
    %575 = vmatpush.bf16.xpose.msra.mxu0 %v566
    %576 = vmatmul.bf16.gmra.mxu0 %v563
    %v577 = vpop.f32.mrf.mxu0
    %v578 = vadd.f32 0.0, %v577
    %v579 = vpop.f32.mrf.mxu0
    %v580 = vadd.f32 0.0, %v579
    %581 = vdwg.mxu0
    %v582 = vsel %vm435, %v578, -inf
    %583 = vmax.xlane.f32.xlu0 %v582
    %v584 = vpop.xlane.xlu0 %583
    %v585 = vsel %vm435, %v580, -inf
    %586 = vmax.xlane.f32.xlu0 %v585
    %v587 = vpop.xlane.xlu0 %586
    %v588 = vsub.f32 %v578, %v584
    %v589 = vsub.f32 %v580, %v587
    %v590 = vmul.f32 %v588, 1.442695
    %v591 = vpow.pop %v590
    %v592 = vmul.f32 %v589, 1.442695
    %v593 = vpow.pop %v592
    %v594 = vsel %vm435, %v591, 0.0
    %595 = vadd.xlane.f32.xlu0 %v594
    %v596 = vpop.xlane.xlu0 %595
    %v597 = vsel %vm435, %v593, 0.0
    %598 = vadd.xlane.f32.xlu0 %v597
    %v599 = vpop.xlane.xlu0 %598
    %v600 = vrcp.pop %v596
    %v601 = vrcp.pop %v599
    %v602 = vmul.f32 %v591, %v600
    %v603 = vmul.f32 %v593, %v601
    %v604 = vpack.c.bf16 %v603, %v602
    %v605 = vpack.c.bf16 %v410, %v408
    %v607 = vsel %vm435, %v604, 0
    %609 = vmatpush.bf16.msra.mxu0 0
    %610 = vmatpush.bf16.msra.mxu0 0
    %611 = vmatpush.bf16.msra.mxu0 0
    %612 = vmatpush.bf16.msra.mxu0 0
    %613 = vmatpush.bf16.msra.mxu0 0
    %614 = vmatpush.bf16.msra.mxu0 0
    %615 = vmatpush.bf16.msra.mxu0 0
    %616 = vmatpush.bf16.msra.mxu0 %v605
    %617 = vmatmul.bf16.gmra.mxu0 %v607
    %v618 = vpop.f32.mrf.mxu0
    %v619 = vadd.f32 0.0, %v618
    %v620 = vpop.f32.mrf.mxu0
    %v621 = vadd.f32 0.0, %v620
    %622 = vdwg.mxu0
    %623 = vst.msk [vmem:[#allocation2 + $0x10] sm:$0xff] %vm414, %v619
    %624 = vst.msk [vmem:[#allocation2 + $0x18] sm:$0xff] %vm414, %v621
    %626 = vrot.lane.b32.xlu0 %v560, 64
    %v627 = vpop.permute.xlu0 %626
    %629 = vrot.lane.b32.xlu0 %v561, 64
    %v630 = vpop.permute.xlu0 %629
    %v632 = vsel %vm414, %v627, 0
    %v635 = vsel %vm414, %v630, 0
    %637 = vmatpush.bf16.xpose.msra.mxu0 0
    %638 = vmatpush.bf16.xpose.msra.mxu0 0
    %639 = vmatpush.bf16.xpose.msra.mxu0 0
    %640 = vmatpush.bf16.xpose.msra.mxu0 0
    %641 = vmatpush.bf16.xpose.msra.mxu0 0
    %642 = vmatpush.bf16.xpose.msra.mxu0 0
    %643 = vmatpush.bf16.xpose.msra.mxu0 0
    %644 = vmatpush.bf16.xpose.msra.mxu0 %v635
    %645 = vmatmul.bf16.gmra.mxu0 %v632
    %v646 = vpop.f32.mrf.mxu0
    %v647 = vadd.f32 0.0, %v646
    %v648 = vpop.f32.mrf.mxu0
    %v649 = vadd.f32 0.0, %v648
    %650 = vdwg.mxu0
    %v651 = vsel %vm435, %v647, -inf
    %652 = vmax.xlane.f32.xlu0 %v651
    %v653 = vpop.xlane.xlu0 %652
    %v654 = vsel %vm435, %v649, -inf
    %655 = vmax.xlane.f32.xlu0 %v654
    %v656 = vpop.xlane.xlu0 %655
    %v657 = vsub.f32 %v647, %v653
    %v658 = vsub.f32 %v649, %v656
    %v659 = vmul.f32 %v657, 1.442695
    %v660 = vpow.pop %v659
    %v661 = vmul.f32 %v658, 1.442695
    %v662 = vpow.pop %v661
    %v663 = vsel %vm435, %v660, 0.0
    %664 = vadd.xlane.f32.xlu0 %v663
    %v665 = vpop.xlane.xlu0 %664
    %v666 = vsel %vm435, %v662, 0.0
    %667 = vadd.xlane.f32.xlu0 %v666
    %v668 = vpop.xlane.xlu0 %667
    %v669 = vrcp.pop %v665
    %v670 = vrcp.pop %v668
    %v671 = vmul.f32 %v660, %v669
    %v672 = vmul.f32 %v662, %v670
    %v673 = vpack.c.bf16 %v672, %v671
    %675 = vrot.lane.b32.xlu0 %v605, 64
    %v676 = vpop.permute.xlu0 %675
    %v679 = vsel %vm435, %v673, 0
    %681 = vmatpush.bf16.msra.mxu0 0
    %682 = vmatpush.bf16.msra.mxu0 0
    %683 = vmatpush.bf16.msra.mxu0 0
    %684 = vmatpush.bf16.msra.mxu0 0
    %685 = vmatpush.bf16.msra.mxu0 0
    %686 = vmatpush.bf16.msra.mxu0 0
    %687 = vmatpush.bf16.msra.mxu0 0
    %688 = vmatpush.bf16.msra.mxu0 %v676
    %689 = vmatmul.bf16.gmra.mxu0 %v679
    %v690 = vpop.f32.mrf.mxu0
    %v691 = vadd.f32 0.0, %v690
    %v692 = vpop.f32.mrf.mxu0
    %v693 = vadd.f32 0.0, %v692
    %694 = vdwg.mxu0
    %697 = vrot.lane.b32.xlu0 %v691, 64
    %v698 = vpop.permute.xlu0 %697
    %699 = vrot.lane.b32.xlu0 %v693, 64
    %v700 = vpop.permute.xlu0 %699
    %703 = vst.msk [vmem:[#allocation2 + $0x10] sm:$0xff] %vm557, %v698
    %704 = vst.msk [vmem:[#allocation2 + $0x18] sm:$0xff] %vm557, %v700
    %v705 = vld [vmem:[#allocation2] sm:$0xff]
    %v706 = vld [vmem:[#allocation2 + $0x8] sm:$0xff]
    %v707 = vld [vmem:[#allocation2 + $0x10] sm:$0xff]
    %v708 = vld [vmem:[#allocation2 + $0x18] sm:$0xff]
    %v709 = vpack.c.bf16 %v706, %v705
    %v710 = vpack.c.bf16 %v708, %v707
    %v711 = vld [vmem:[#allocation9] sm:$0xf]
    %v712 = vld [vmem:[#allocation9 + $0x4] sm:$0xf]
    %v713 = vld [vmem:[#allocation9 + $0x8] sm:$0xf]
    %v714 = vld [vmem:[#allocation9 + $0xc] sm:$0xf]
    %v715 = vld [vmem:[#allocation9 + $0x10] sm:$0xf]
    %v716 = vld [vmem:[#allocation9 + $0x14] sm:$0xf]
    %v717 = vld [vmem:[#allocation9 + $0x18] sm:$0xf]
    %v718 = vld [vmem:[#allocation9 + $0x1c] sm:$0xf]
    %v719 = vld [vmem:[#allocation9 + $0x20] sm:$0xf]
    %v720 = vld [vmem:[#allocation9 + $0x24] sm:$0xf]
    %v721 = vld [vmem:[#allocation9 + $0x28] sm:$0xf]
    %v722 = vld [vmem:[#allocation9 + $0x2c] sm:$0xf]
    %v723 = vld [vmem:[#allocation9 + $0x30] sm:$0xf]
    %v724 = vld [vmem:[#allocation9 + $0x34] sm:$0xf]
    %v725 = vld [vmem:[#allocation9 + $0x38] sm:$0xf]
    %v726 = vld [vmem:[#allocation9 + $0x3c] sm:$0xf]
    %v727 = vld [vmem:[%s5] sm:$0x1]
    %v729 = vperm.slane %v727, 0
    %v747 = vunpack.c.l.b16 %v711
    %v748 = vunpack.c.l.b16 %v712
    %v749 = vunpack.c.l.b16 %v713
    %v750 = vunpack.c.l.b16 %v714
    %v751 = vunpack.c.l.b16 %v715
    %v752 = vunpack.c.l.b16 %v716
    %v753 = vunpack.c.l.b16 %v717
    %v754 = vunpack.c.l.b16 %v718
    %v755 = vunpack.c.l.b16 %v719
    %v756 = vunpack.c.l.b16 %v720
    %v757 = vunpack.c.l.b16 %v721
    %v758 = vunpack.c.l.b16 %v722
    %v759 = vunpack.c.l.b16 %v723
    %v760 = vunpack.c.l.b16 %v724
    %v761 = vunpack.c.l.b16 %v725
    %v762 = vunpack.c.l.b16 %v726
    %v763 = vpack.c.b16 %v748, %v747
    %v764 = vpack.c.b16 %v750, %v749
    %v765 = vpack.c.b16 %v752, %v751
    %v766 = vpack.c.b16 %v754, %v753
    %v767 = vpack.c.b16 %v756, %v755
    %v768 = vpack.c.b16 %v758, %v757
    %v769 = vpack.c.b16 %v760, %v759
    %v770 = vpack.c.b16 %v762, %v761
    %779 = vmatpush.bf16.msra.mxu0 %v770
    %780 = vmatpush.bf16.msra.mxu0 %v769
    %781 = vmatpush.bf16.msra.mxu0 %v768
    %782 = vmatpush.bf16.msra.mxu0 %v767
    %783 = vmatpush.bf16.msra.mxu0 %v766
    %784 = vmatpush.bf16.msra.mxu0 %v765
    %785 = vmatpush.bf16.msra.mxu0 %v764
    %786 = vmatpush.bf16.msra.mxu0 %v763
    %787 = vmatmul.bf16.gmra.mxu0 %v709
    %v788 = vpop.f32.mrf.mxu0
    %v789 = vadd.f32 %v729, %v788
    %v790 = vpop.f32.mrf.mxu0
    %v791 = vadd.f32 %v729, %v790
    %792 = vmatmul.bf16.gmra.mxu0 %v710
    %v793 = vpop.f32.mrf.mxu0
    %v794 = vadd.f32 %v729, %v793
    %v795 = vpop.f32.mrf.mxu0
    %v796 = vadd.f32 %v729, %v795
    %797 = vdwg.mxu0
    %798 = vst [vmem:[#allocation11] sm:$0xff] %v789
    %799 = vst [vmem:[#allocation11 + $0x8] sm:$0xff] %v791
    %800 = vst [vmem:[#allocation11 + $0x10] sm:$0xff] %v794
    %801 = vst [vmem:[#allocation11 + $0x18] sm:$0xff] %v796
    // Predicated region
    $region42: #{tpu_custom_call.1} parent=1 // pred_check
      _
    $region43: #{tpu_custom_call.1} parent=1 // pred_check_branch
      %803 = sbr.rel (0) target = $region45
    $region44: #{tpu_custom_call.1} parent=1 // pred_region
      %805 = vsyncadd [#allocation5], 0
      %s806 = sshll.u32 [#allocation11], 4
      %s807 = int_to_ptr.vmem [resolvable:$true] %s806
      %s808 = sshll.u32 %s6, 4
      %s809 = int_to_ptr.hbm [resolvable:$true] %s808
      %814 = dma.vmem_to_hbm [thread:$0]  %s807, 512, %s809, [#allocation5], 128, 128, 8
    $region45: #{tpu_custom_call.1} parent=1 // pred_fallthru
      _
    // Predicated region
    $region46: #{tpu_custom_call.1} parent=1 // pred_check
      _
    $region47: #{tpu_custom_call.1} parent=1 // pred_check_branch
      %816 = sbr.rel (0) target = $region49
    $region48: #{tpu_custom_call.1} parent=1 // pred_region
      %818 = dma.done [#allocation5], 512
    $region49: #{tpu_custom_call.1} parent=1 // pred_fallthru
      _
    %819 = vsyncpa [#allocation4], 1
    %820 = vsyncpa [#allocation7], 1
    %821 = vsyncpa [#allocation10], 1
    %822 = vsyncpa [#allocation5], 1

</llo_original>
